<compile_context>
chip_gen: v7x
topology: tpu7x:2x2x1
jax: 0.10.0
libtpu: 0.0.40
codegen_flags: <defaults>
</compile_context>

<pallas_src>
import functools
import random

import jax
import jax.numpy as jnp
from jax.experimental import pallas as pl
from jax.experimental.pallas import tpu as pltpu


def _round_up(n, m):
    return ((n + m - 1) // m) * m


def _choose_tiles(B, block_b):
    """Pick (TB, b_pad): 8-aligned tile, >=2 (even) grid steps when batch allows,
    and waste bounded to a few rows per tile (not up to block_b-1)."""
    b8 = _round_up(max(B, 1), 8)
    n_tiles = max(1, -(-b8 // block_b))
    if b8 >= 16:
        n_tiles = max(n_tiles, 2)          # v7x: give both TensorCores a grid step
    if n_tiles > 1 and n_tiles % 2:
        n_tiles += 1                       # even step count balances the two TCs
    TB = _round_up(-(-b8 // n_tiles), 8)
    return TB, TB * n_tiles


# ---------------------------------------------------------------------------
# Fused MLP body shared by the forward and action kernels.
#   x      : (TB, S) f32/bf16 states in natural width S (no host-side padding)
#   w_ref  : (3, P, P) bf16 packed weights, w_ref[l, :in_l, :out_l] = W_l
#   b_ref  : (8, P) f32, rows 0..2 = b1, b2, b3 (f32 bias precision)
# Padded lanes of the result are exactly 0 (weight/bias pad columns are 0).
# ---------------------------------------------------------------------------
def _mlp(x, w_ref, b_ref):
    s = x.shape[-1]
    xb = x.astype(jnp.bfloat16)
    b = b_ref[...]                                           # (8, P) f32
    w1 = w_ref[0]                                            # (P, P) bf16
    h1 = jnp.dot(xb, w1[:s, :], preferred_element_type=jnp.float32) + b[0:1, :]
    h1 = jnp.maximum(h1, 0.0).astype(jnp.bfloat16)           # ReLU in f32 (v5e), then bf16
    h2 = jnp.dot(h1, w_ref[1], preferred_element_type=jnp.float32) + b[1:2, :]
    h2 = jnp.maximum(h2, 0.0).astype(jnp.bfloat16)
    q = jnp.dot(h2, w_ref[2], preferred_element_type=jnp.float32) + b[2:3, :]
    return q                                                 # (TB, P) f32


def qvalue_fwd_kernel(x_ref, w_ref, b_ref, out_ref):
    out_ref[...] = _mlp(x_ref[...], w_ref, b_ref).astype(out_ref.dtype)


def qvalue_act_kernel(x_ref, w_ref, b_ref, act_ref, *, action_number):
    # Fused forward + masked greedy argmax, vectorized over all rows of x.
    q = _mlp(x_ref[...], w_ref, b_ref)                       # (B, P) f32
    lane = jax.lax.broadcasted_iota(jnp.int32, q.shape, 1)
    qm = jnp.where(lane < action_number, q, -jnp.inf)        # mask padded lanes
    max_q = jnp.max(qm, axis=-1, keepdims=True)              # (B, 1)
    big = jnp.float32(q.shape[-1])
    idx = jnp.min(jnp.where(qm == max_q, lane.astype(jnp.float32), big),
                  axis=-1, keepdims=True)                    # first-occurrence argmax
    act_ref[...] = idx.astype(jnp.int32)


# ---------------------------------------------------------------------------
# Parameter packing (done once per param set, outside the hot path).
# ---------------------------------------------------------------------------
def pack_qvalue_params(params, state_dim, hidden, action_number):
    """Pack weights into one lane-aligned bf16 (3,P,P) buffer + f32 (8,P) biases."""
    w1, b1, w2, b2, w3, b3 = params
    P = _round_up(max(state_dim, hidden, action_number), 128)
    w = jnp.zeros((3, P, P), jnp.float32)
    w = w.at[0, :state_dim, :hidden].set(w1)
    w = w.at[1, :hidden, :hidden].set(w2)
    w = w.at[2, :hidden, :action_number].set(w3)
    b = jnp.zeros((8, P), jnp.float32)
    b = b.at[0, :hidden].set(b1.reshape(-1))
    b = b.at[1, :hidden].set(b2.reshape(-1))
    b = b.at[2, :action_number].set(b3.reshape(-1))
    return w.astype(jnp.bfloat16), b, P


# ---------------------------------------------------------------------------
# Wrappers.
# ---------------------------------------------------------------------------
@functools.partial(jax.jit, static_argnames=("block_b",))
def qvalue_forward(x, w_packed, b_packed, *, block_b=1024):
    """Fused Linear->ReLU->Linear->ReLU->Linear Q-network forward pass.

    Returns the lane-dense padded slab (b_pad, P) in bf16.  Rows >= B and lanes
    >= action_number are padding (lanes beyond action_number are exactly 0 for
    valid rows); consumers that reduce over actions must mask lanes >= action_number
    (the fused action kernel below does).
    """
    B, S = x.shape
    P = w_packed.shape[-1]
    TB, b_pad = _choose_tiles(B, block_b)
    n_tiles = b_pad // TB
    flops = 2 * b_pad * P * (S + 2 * P)
    bytes_accessed = (x.size * x.dtype.itemsize + w_packed.size * 2
                      + b_packed.size * 4 + b_pad * P * 2)
    return pl.pallas_call(
        qvalue_fwd_kernel,
        out_shape=jax.ShapeDtypeStruct((b_pad, P), jnp.bfloat16),
        grid=(n_tiles,),
        in_specs=[
            pl.BlockSpec((TB, S), lambda i: (i, 0)),          # natural-width states
            pl.BlockSpec((3, P, P), lambda i: (0, 0, 0)),     # weights resident
            pl.BlockSpec((8, P), lambda i: (0, 0)),           # f32 biases resident
        ],
        out_specs=pl.BlockSpec((TB, P), lambda i: (i, 0)),
        compiler_params=pltpu.CompilerParams(
            dimension_semantics=("parallel",),
            vmem_limit_bytes=32 * 1024 * 1024),
        cost_estimate=pl.CostEstimate(
            flops=flops, transcendentals=0, bytes_accessed=bytes_accessed),
    )(x, w_packed, b_packed)


@functools.partial(jax.jit, static_argnames=("action_number",))
def qvalue_greedy_actions(x, w_packed, b_packed, *, action_number):
    """Greedy branch of Qvalue.action(), batched: one fused forward+argmax launch
    for all rows of x; returns (B,) int32 actions."""
    B, S = x.shape
    P = w_packed.shape[-1]
    kernel = functools.partial(qvalue_act_kernel, action_number=action_number)
    vmem = pl.BlockSpec(memory_space=pltpu.MemorySpace.VMEM)
    acts = pl.pallas_call(
        kernel,
        out_shape=jax.ShapeDtypeStruct((B, 1), jnp.int32),
        in_specs=[vmem, vmem, vmem],
        out_specs=vmem,
        cost_estimate=pl.CostEstimate(
            flops=2 * B * P * (S + 2 * P), transcendentals=0,
            bytes_accessed=x.size * x.dtype.itemsize + w_packed.size * 2
                           + b_packed.size * 4 + B * 4),
    )(x, w_packed, b_packed)
    return acts[:, 0]


def qvalue_action(x, w_packed, b_packed, epsilon, *, action_number):
    """Epsilon-greedy action(), matching the PyTorch Qvalue.action() semantics."""
    if random.random() < epsilon:
        return random.randint(0, action_number - 1)
    acts = qvalue_greedy_actions(jnp.asarray(x).reshape(1, -1), w_packed, b_packed,
                                 action_number=action_number)
    return int(acts[0])           # host sync, same as .item() in the torch spec


def init_params(key, state_dim, hidden, action_number):
    k1, k2, k3 = jax.random.split(key, 3)
    scale1 = 1.0 / jnp.sqrt(state_dim)
    scale2 = 1.0 / jnp.sqrt(hidden)
    w1 = jax.random.uniform(k1, (state_dim, hidden), jnp.float32, -scale1, scale1)
    b1 = jnp.zeros((1, hidden), jnp.float32)
    w2 = jax.random.uniform(k2, (hidden, hidden), jnp.float32, -scale2, scale2)
    b2 = jnp.zeros((1, hidden), jnp.float32)
    w3 = jax.random.uniform(k3, (hidden, action_number), jnp.float32, -scale2, scale2)
    b3 = jnp.zeros((1, action_number), jnp.float32)
    return (w1, b1, w2, b2, w3, b3)


if __name__ == "__main__":
    key = jax.random.PRNGKey(0)
    kx, kp = jax.random.split(key)

    B, state_dim, hidden, action_number = 2, 32, 64, 8
    x = jax.random.normal(kx, (B, state_dim), jnp.float32)
    params = init_params(kp, state_dim, hidden, action_number)
    w_packed, b_packed, P = pack_qvalue_params(params, state_dim, hidden, action_number)

    q_pad = qvalue_forward(x, w_packed, b_packed)
    q_pad = jax.block_until_ready(q_pad)
    assert q_pad.shape[1] == P and q_pad.dtype == jnp.bfloat16

    # Pure-f32 reference (kernel uses bf16 MXU inputs / bf16 output, f32 accumulation).
    w1, b1, w2, b2, w3, b3 = params
    h1 = jnp.maximum(x @ w1 + b1, 0.0)
    h2 = jnp.maximum(h1 @ w2 + b2, 0.0)
    q_ref = h2 @ w3 + b3

    # Consumer-side slice/mask of the padded slab (done here only for the check).
    q = q_pad[:B, :action_number].astype(jnp.float32)
    assert q.shape == (B, action_number)
    assert jnp.allclose(q, q_ref, atol=5e-2, rtol=5e-2), float(jnp.max(jnp.abs(q - q_ref)))
    # Padded action lanes of valid rows are exactly zero.
    assert float(jnp.max(jnp.abs(q_pad[:B, action_number:]))) == 0.0

    # Batched greedy actions: one fused forward+argmax launch for all states.
    acts = jax.block_until_ready(
        qvalue_greedy_actions(x, w_packed, b_packed, action_number=action_number))
    assert acts.shape == (B,)
    for i in range(B):
        a = int(acts[i])
        assert 0 <= a < action_number
        assert float(q_ref[i, a]) >= float(jnp.max(q_ref[i])) - 5e-2

    # Epsilon-greedy single-state path (host RNG for the random branch).
    act0 = qvalue_action(x[0], w_packed, b_packed, 0.0, action_number=action_number)
    assert 0 <= act0 < action_number
    assert float(q_ref[0, act0]) >= float(jnp.max(q_ref[0])) - 5e-2

    print("KERNEL_OK")
</pallas_src>

<mosaic_0001>
module attributes {stable_mosaic.version = 11 : i64} {
  func.func @qvalue_fwd_kernel(%arg0: i32, %arg1: memref<8x32xf32, #tpu.memory_space<vmem>>, %arg2: memref<3x128x128xbf16, #tpu.memory_space<vmem>>, %arg3: memref<8x128xf32, #tpu.memory_space<vmem>>, %arg4: memref<8x128xbf16, #tpu.memory_space<vmem>>) attributes {dimension_semantics = [#tpu.dimension_semantics<parallel>], iteration_bounds = array<i64: 1>, scalar_prefetch = 0 : i64, scratch_operands = 0 : i64, tpu.core_type = #tpu.core_type<tc>, window_params = [{transform_indices = @transform_0, window_bounds = array<i64: 8, 32>}, {pipeline_mode = #tpu.pipeline_mode<synchronous>, transform_indices = @transform_1, window_bounds = array<i64: 3, 128, 128>}, {pipeline_mode = #tpu.pipeline_mode<synchronous>, transform_indices = @transform_2, window_bounds = array<i64: 8, 128>}, {transform_indices = @transform_3, window_bounds = array<i64: 8, 128>}]} {
    %c0 = arith.constant 0 : index
    %c0_0 = arith.constant 0 : index
    %0 = vector.load %arg1[%c0, %c0_0] : memref<8x32xf32, #tpu.memory_space<vmem>>, vector<8x32xf32>
    %1 = arith.truncf %0 : vector<8x32xf32> to vector<8x32xbf16>
    %c0_1 = arith.constant 0 : index
    %c0_2 = arith.constant 0 : index
    %2 = vector.load %arg3[%c0_1, %c0_2] : memref<8x128xf32, #tpu.memory_space<vmem>>, vector<8x128xf32>
    %c0_3 = arith.constant 0 : index
    %c0_4 = arith.constant 0 : index
    %c0_5 = arith.constant 0 : index
    %3 = vector.load %arg2[%c0_3, %c0_4, %c0_5] : memref<3x128x128xbf16, #tpu.memory_space<vmem>>, vector<1x128x128xbf16>
    %4 = vector.shape_cast %3 : vector<1x128x128xbf16> to vector<128x128xbf16>
    %5 = vector.extract_strided_slice %4 {offsets = [0, 0], sizes = [32, 128], strides = [1, 1]} : vector<128x128xbf16> to vector<32x128xbf16>
    %cst = arith.constant dense<0.000000e+00> : vector<8x128xf32>
    %6 = tpu.matmul %1, %5, %cst {dimension_numbers = #tpu.dot_dimension_numbers<[1], [0], [0], [1], [0, 0, 1, 1], [], []>} : vector<8x32xbf16>, vector<32x128xbf16>, vector<8x128xf32> -> vector<8x128xf32>
    %7 = vector.extract_strided_slice %2 {offsets = [0, 0], sizes = [1, 128], strides = [1, 1]} : vector<8x128xf32> to vector<1x128xf32>
    %8 = vector.broadcast %7 : vector<1x128xf32> to vector<8x128xf32>
    %9 = arith.addf %6, %8 : vector<8x128xf32>
    %cst_6 = arith.constant 0.000000e+00 : f32
    %10 = vector.broadcast %cst_6 : f32 to vector<8x128xf32>
    %11 = arith.maximumf %9, %10 : vector<8x128xf32>
    %12 = arith.truncf %11 : vector<8x128xf32> to vector<8x128xbf16>
    %c1 = arith.constant 1 : index
    %c0_7 = arith.constant 0 : index
    %c0_8 = arith.constant 0 : index
    %13 = vector.load %arg2[%c1, %c0_7, %c0_8] : memref<3x128x128xbf16, #tpu.memory_space<vmem>>, vector<1x128x128xbf16>
    %14 = vector.shape_cast %13 : vector<1x128x128xbf16> to vector<128x128xbf16>
    %cst_9 = arith.constant dense<0.000000e+00> : vector<8x128xf32>
    %15 = tpu.matmul %12, %14, %cst_9 {dimension_numbers = #tpu.dot_dimension_numbers<[1], [0], [0], [1], [0, 0, 1, 1], [], []>} : vector<8x128xbf16>, vector<128x128xbf16>, vector<8x128xf32> -> vector<8x128xf32>
    %16 = vector.extract_strided_slice %2 {offsets = [1, 0], sizes = [1, 128], strides = [1, 1]} : vector<8x128xf32> to vector<1x128xf32>
    %17 = vector.broadcast %16 : vector<1x128xf32> to vector<8x128xf32>
    %18 = arith.addf %15, %17 : vector<8x128xf32>
    %cst_10 = arith.constant 0.000000e+00 : f32
    %19 = vector.broadcast %cst_10 : f32 to vector<8x128xf32>
    %20 = arith.maximumf %18, %19 : vector<8x128xf32>
    %21 = arith.truncf %20 : vector<8x128xf32> to vector<8x128xbf16>
    %c2 = arith.constant 2 : index
    %c0_11 = arith.constant 0 : index
    %c0_12 = arith.constant 0 : index
    %22 = vector.load %arg2[%c2, %c0_11, %c0_12] : memref<3x128x128xbf16, #tpu.memory_space<vmem>>, vector<1x128x128xbf16>
    %23 = vector.shape_cast %22 : vector<1x128x128xbf16> to vector<128x128xbf16>
    %cst_13 = arith.constant dense<0.000000e+00> : vector<8x128xf32>
    %24 = tpu.matmul %21, %23, %cst_13 {dimension_numbers = #tpu.dot_dimension_numbers<[1], [0], [0], [1], [0, 0, 1, 1], [], []>} : vector<8x128xbf16>, vector<128x128xbf16>, vector<8x128xf32> -> vector<8x128xf32>
    %25 = vector.extract_strided_slice %2 {offsets = [2, 0], sizes = [1, 128], strides = [1, 1]} : vector<8x128xf32> to vector<1x128xf32>
    %26 = vector.broadcast %25 : vector<1x128xf32> to vector<8x128xf32>
    %27 = arith.addf %24, %26 : vector<8x128xf32>
    %28 = arith.truncf %27 : vector<8x128xf32> to vector<8x128xbf16>
    %c0_14 = arith.constant 0 : index
    %c0_15 = arith.constant 0 : index
    %29 = vector.load %arg4[%c0_14, %c0_15] : memref<8x128xbf16, #tpu.memory_space<vmem>>, vector<8x128xbf16>
    tpu.vector_store %arg4[%c0_14, %c0_15], %28 {strides = array<i32>} : memref<8x128xbf16, #tpu.memory_space<vmem>>, vector<8x128xbf16>,
    return
  }
  func.func @transform_0(%arg0: i32) -> (i32, i32) {
    %c0_i32 = arith.constant 0 : i32
    %c0_i32_0 = arith.constant 0 : i32
    return %arg0, %c0_i32 : i32, i32
  }
  func.func @transform_1(%arg0: i32) -> (i32, i32, i32) {
    %c0_i32 = arith.constant 0 : i32
    %c0_i32_0 = arith.constant 0 : i32
    %c0_i32_1 = arith.constant 0 : i32
    %c0_i32_2 = arith.constant 0 : i32
    return %c0_i32, %c0_i32_0, %c0_i32_1 : i32, i32, i32
  }
  func.func @transform_2(%arg0: i32) -> (i32, i32) {
    %c0_i32 = arith.constant 0 : i32
    %c0_i32_0 = arith.constant 0 : i32
    %c0_i32_1 = arith.constant 0 : i32
    return %c0_i32, %c0_i32_0 : i32, i32
  }
  func.func @transform_3(%arg0: i32) -> (i32, i32) {
    %c0_i32 = arith.constant 0 : i32
    %c0_i32_0 = arith.constant 0 : i32
    return %arg0, %c0_i32 : i32, i32
  }
}

</mosaic_0001>

<llo_original>
// kernel: qvalue_forward.1
$region0: #{qvalue_forward.1}
  #allocation0 [shape = 'u32[]', space=smem, size = 0x4, offset = 0x4, fixed_abs, tag = 'smem constant byte address 0x4 - core index']
  #allocation1 [shape = 'u32[144,128]{1,0:T(1,128)}', space=vmem, size = 0x12000, scoped, tag = 'internal scratch']
  %s0 = inlined_call_operand.hbm [shape: f32[2,32], index: 0, kind: input, shape index: {}]
  %s1 = inlined_call_operand.hbm [shape: bf16[3,128,128], index: 1, kind: input, shape index: {}]
  %s2 = inlined_call_operand.hbm [shape: f32[8,128], index: 2, kind: input, shape index: {}]
  %s3 = inlined_call_operand.hbm [shape: bf16[8,128], index: 3, kind: output, shape index: {}]
  %s4 = sld [smem:[#allocation0]]
  $region34: #{qvalue_forward.1} parent=0
    _
  %s6 = ssub.s32 1, %s4
  %s7 = scalar_select 0, %s6, %s4
  $region1: #{qvalue_forward.1} parent=0
    #allocation2 [shape = 'u8[4096]{0}', space=vmem, size = 0x1000, scoped, tag = 'input window, operand 0, single buffered']
    #allocation3 [shape = 's32[1]{0}', space=sflag, size = 0x4, scoped, tag = 'scoped memory for qvalue_forward.1']
    #allocation4 [shape = 's32[1]{0}', space=sflag, size = 0x4, scoped, tag = 'scoped memory for qvalue_forward.1']
    #allocation5 [shape = 'u8[98304]{0}', space=vmem, size = 0x18000, scoped, tag = 'input window, operand 1, single buffered']
    #allocation6 [shape = 's32[1]{0}', space=sflag, size = 0x4, scoped, tag = 'scoped memory for qvalue_forward.1']
    #allocation7 [shape = 'u8[4096]{0}', space=vmem, size = 0x1000, scoped, tag = 'input window, operand 2, single buffered']
    #allocation8 [shape = 'u8[2048]{0}', space=vmem, size = 0x800, scoped, tag = 'output window, operand 0, single buffered']
    %8 = vsyncpa [#allocation3], 0
    %9 = vsyncpa [#allocation6], 0
    %10 = vsyncpa [#allocation4], 0
    // Predicated region
    $region2: #{qvalue_forward.1} parent=1 // pred_check
      _
    $region3: #{qvalue_forward.1} parent=1 // pred_check_branch
      %12 = sbr.rel (0) target = $region5
    $region4: #{qvalue_forward.1} parent=1 // pred_region
      %s14 = ssub.s32 128, 32
      %15 = vsyncadd [#allocation3], %s14
      %s16 = sshll.u32 [#allocation2], 4
      %s17 = int_to_ptr.vmem [resolvable:$true] %s16
      %22 = dma.hbm_to_vmem [thread:$0]  %s0, 32, %s17, [#allocation3], 32, 32, 2
    $region5: #{qvalue_forward.1} parent=1 // pred_fallthru
      _
    // Predicated region
    $region6: #{qvalue_forward.1} parent=1 // pred_check
      _
    $region7: #{qvalue_forward.1} parent=1 // pred_check_branch
      %24 = sbr.rel (0) target = $region9
    $region8: #{qvalue_forward.1} parent=1 // pred_region
      %s26 = ssub.s32 3072, 3072
      %27 = vsyncadd [#allocation6], %s26
      %s28 = sshll.u32 [#allocation5], 4
      %s29 = int_to_ptr.vmem [resolvable:$true] %s28
      %34 = dma.hbm_to_vmem [thread:$0]  %s1, 3072, %s29, [#allocation6], 64, 64, 4
    $region9: #{qvalue_forward.1} parent=1 // pred_fallthru
      _
    // Predicated region
    $region10: #{qvalue_forward.1} parent=1 // pred_check
      _
    $region11: #{qvalue_forward.1} parent=1 // pred_check_branch
      %36 = sbr.rel (0) target = $region13
    $region12: #{qvalue_forward.1} parent=1 // pred_region
      %s38 = ssub.s32 128, 128
      %39 = vsyncadd [#allocation6], %s38
      %s41 = sshll.u32 [#allocation7], 4
      %s42 = int_to_ptr.vmem [resolvable:$true] %s41
      %44 = dma.hbm_to_vmem [thread:$0]  %s2, 128, %s42, [#allocation6]
    $region13: #{qvalue_forward.1} parent=1 // pred_fallthru
      _
    // Predicated region
    $region14: #{qvalue_forward.1} parent=1 // pred_check
      _
    $region15: #{qvalue_forward.1} parent=1 // pred_check_branch
      %46 = sbr.rel (0) target = $region17
    $region16: #{qvalue_forward.1} parent=1 // pred_region
      %47 = dma.done [#allocation3], 128
    $region17: #{qvalue_forward.1} parent=1 // pred_fallthru
      _
    // Predicated region
    $region18: #{qvalue_forward.1} parent=1 // pred_check
      _
    $region19: #{qvalue_forward.1} parent=1 // pred_check_branch
      %49 = sbr.rel (0) target = $region21
    $region20: #{qvalue_forward.1} parent=1 // pred_region
      %50 = dma.done [#allocation6], 3072
    $region21: #{qvalue_forward.1} parent=1 // pred_fallthru
      _
    // Predicated region
    $region22: #{qvalue_forward.1} parent=1 // pred_check
      _
    $region23: #{qvalue_forward.1} parent=1 // pred_check_branch
      %52 = sbr.rel (0) target = $region25
    $region24: #{qvalue_forward.1} parent=1 // pred_region
      %53 = dma.done [#allocation6], 128
    $region25: #{qvalue_forward.1} parent=1 // pred_fallthru
      _
    %v55 = vld [vmem:[#allocation2] sm:$0xff]
    %v56 = vpack.c.bf16 %v55, %v55
    %v57 = vld [vmem:[#allocation7] sm:$0xff]
    %v58 = vld [vmem:[#allocation5] sm:$0xf]
    %v59 = vld [vmem:[#allocation5 + $0x4] sm:$0xf]
    %v60 = vld [vmem:[#allocation5 + $0x8] sm:$0xf]
    %v61 = vld [vmem:[#allocation5 + $0xc] sm:$0xf]
    %v62 = vlaneseq
    %v63 = vshrl.u32 %v62, 7
    %v64 = vsub.s32 0, %v63
    %v65 = vrot.slane %v57, %v64
    %v70 = vunpack.c.l.b16 %v58
    %v71 = vunpack.c.l.b16 %v59
    %v72 = vunpack.c.l.b16 %v60
    %v73 = vunpack.c.l.b16 %v61
    %v74 = vpack.c.b16 %v71, %v70
    %v75 = vpack.c.b16 %v73, %v72
    %vm78 = vcmask 261120
    %v80 = vsel %vm78, %v56, 0
    %82 = vmatprep.subr.bf16.mxu0 0
    %83 = vmatpush1.bf16.msra.mxu0 %v74
    %84 = vmatprep.subr.bf16.mxu0 0
    %85 = vmatpush1.bf16.msra.mxu0 %v75
    %86 = vmatprep.subr.bf16.mxu0 0
    %87 = vmatpush1.bf16.msra.mxu0 0
    %88 = vmatprep.subr.bf16.mxu0 0
    %89 = vmatpush1.bf16.msra.mxu0 0
    %90 = vmatprep.subr.bf16.mxu0 0
    %91 = vmatpush1.bf16.msra.mxu0 0
    %92 = vmatprep.subr.bf16.mxu0 0
    %93 = vmatpush1.bf16.msra.mxu0 0
    %94 = vmatprep.subr.bf16.mxu0 0
    %95 = vmatpush1.bf16.msra.mxu0 0
    %96 = vmatprep.subr.bf16.mxu0 0
    %97 = vmatpush1.bf16.msra.mxu0 0
    %98 = vmatprep.subr.bf16.mxu0 0
    %99 = vmatpush1.bf16.msra.mxu0 0
    %100 = vmatprep.subr.bf16.mxu0 0
    %101 = vmatpush1.bf16.msra.mxu0 0
    %102 = vmatprep.subr.bf16.mxu0 0
    %103 = vmatpush1.bf16.msra.mxu0 0
    %104 = vmatprep.subr.bf16.mxu0 0
    %105 = vmatpush1.bf16.msra.mxu0 0
    %106 = vmatprep.subr.bf16.mxu0 0
    %107 = vmatpush1.bf16.msra.mxu0 0
    %108 = vmatprep.subr.bf16.mxu0 0
    %109 = vmatpush1.bf16.msra.mxu0 0
    %110 = vmatprep.subr.bf16.mxu0 0
    %111 = vmatpush1.bf16.msra.mxu0 0
    %112 = vmatprep.subr.bf16.mxu0 0
    %113 = vmatpush1.bf16.msra.mxu0 0
    %114 = vmatprep.mubr.bf16.mxu0 0
    %115 = vmatmul.mubr.bf16.gmra.mrb[0].mxu0 %v80
    %v116 = vpop.f32.mrb[0].mxu0
    %v117 = vadd.f32 %v65, %v116
    %v118 = vpop.f32.mrb[0].mxu0
    %v119 = vpop.f32.mrb[0].mxu0
    %v120 = vpop.f32.mrb[0].mxu0
    %121 = vdwg.mxu0
    %v122 = vmax.f32 %v117, 0.0
    %v123 = vpack.c.bf16 %v122, %v122
    %s124 = scalar_lea.vmem [#allocation5], 64
    %v125 = vld [vmem:[%s124] sm:$0xf]
    %v126 = vld [vmem:[%s124 + $0x4] sm:$0xf]
    %v127 = vld [vmem:[%s124 + $0x8] sm:$0xf]
    %v128 = vld [vmem:[%s124 + $0xc] sm:$0xf]
    %v129 = vld [vmem:[%s124 + $0x10] sm:$0xf]
    %v130 = vld [vmem:[%s124 + $0x14] sm:$0xf]
    %v131 = vld [vmem:[%s124 + $0x18] sm:$0xf]
    %v132 = vld [vmem:[%s124 + $0x1c] sm:$0xf]
    %v133 = vld [vmem:[%s124 + $0x20] sm:$0xf]
    %v134 = vld [vmem:[%s124 + $0x24] sm:$0xf]
    %v135 = vld [vmem:[%s124 + $0x28] sm:$0xf]
    %v136 = vld [vmem:[%s124 + $0x2c] sm:$0xf]
    %v137 = vld [vmem:[%s124 + $0x30] sm:$0xf]
    %v138 = vld [vmem:[%s124 + $0x34] sm:$0xf]
    %v139 = vld [vmem:[%s124 + $0x38] sm:$0xf]
    %v140 = vld [vmem:[%s124 + $0x3c] sm:$0xf]
    %v141 = vlaneseq
    %v142 = vshrl.u32 %v141, 7
    %v143 = vsub.s32 1, %v142
    %v144 = vrot.slane %v57, %v143
    %v161 = vunpack.c.l.b16 %v125
    %v162 = vunpack.c.l.b16 %v126
    %v163 = vunpack.c.l.b16 %v127
    %v164 = vunpack.c.l.b16 %v128
    %v165 = vunpack.c.l.b16 %v129
    %v166 = vunpack.c.l.b16 %v130
    %v167 = vunpack.c.l.b16 %v131
    %v168 = vunpack.c.l.b16 %v132
    %v169 = vunpack.c.l.b16 %v133
    %v170 = vunpack.c.l.b16 %v134
    %v171 = vunpack.c.l.b16 %v135
    %v172 = vunpack.c.l.b16 %v136
    %v173 = vunpack.c.l.b16 %v137
    %v174 = vunpack.c.l.b16 %v138
    %v175 = vunpack.c.l.b16 %v139
    %v176 = vunpack.c.l.b16 %v140
    %v177 = vpack.c.b16 %v162, %v161
    %v178 = vpack.c.b16 %v164, %v163
    %v179 = vpack.c.b16 %v166, %v165
    %v180 = vpack.c.b16 %v168, %v167
    %v181 = vpack.c.b16 %v170, %v169
    %v182 = vpack.c.b16 %v172, %v171
    %v183 = vpack.c.b16 %v174, %v173
    %v184 = vpack.c.b16 %v176, %v175
    %193 = vmatprep.subr.bf16.mxu0 0
    %194 = vmatpush1.bf16.msra.mxu0 %v177
    %195 = vmatprep.subr.bf16.mxu0 0
    %196 = vmatpush1.bf16.msra.mxu0 %v178
    %197 = vmatprep.subr.bf16.mxu0 0
    %198 = vmatpush1.bf16.msra.mxu0 %v179
    %199 = vmatprep.subr.bf16.mxu0 0
    %200 = vmatpush1.bf16.msra.mxu0 %v180
    %201 = vmatprep.subr.bf16.mxu0 0
    %202 = vmatpush1.bf16.msra.mxu0 %v181
    %203 = vmatprep.subr.bf16.mxu0 0
    %204 = vmatpush1.bf16.msra.mxu0 %v182
    %205 = vmatprep.subr.bf16.mxu0 0
    %206 = vmatpush1.bf16.msra.mxu0 %v183
    %207 = vmatprep.subr.bf16.mxu0 0
    %208 = vmatpush1.bf16.msra.mxu0 %v184
    %209 = vmatprep.subr.bf16.mxu0 0
    %210 = vmatpush1.bf16.msra.mxu0 0
    %211 = vmatprep.subr.bf16.mxu0 0
    %212 = vmatpush1.bf16.msra.mxu0 0
    %213 = vmatprep.subr.bf16.mxu0 0
    %214 = vmatpush1.bf16.msra.mxu0 0
    %215 = vmatprep.subr.bf16.mxu0 0
    %216 = vmatpush1.bf16.msra.mxu0 0
    %217 = vmatprep.subr.bf16.mxu0 0
    %218 = vmatpush1.bf16.msra.mxu0 0
    %219 = vmatprep.subr.bf16.mxu0 0
    %220 = vmatpush1.bf16.msra.mxu0 0
    %221 = vmatprep.subr.bf16.mxu0 0
    %222 = vmatpush1.bf16.msra.mxu0 0
    %223 = vmatprep.subr.bf16.mxu0 0
    %224 = vmatpush1.bf16.msra.mxu0 0
    %225 = vmatprep.mubr.bf16.mxu0 0
    %226 = vmatmul.mubr.bf16.gmra.mrb[0].mxu0 %v123
    %v227 = vpop.f32.mrb[0].mxu0
    %v228 = vadd.f32 %v144, %v227
    %v229 = vpop.f32.mrb[0].mxu0
    %v230 = vpop.f32.mrb[0].mxu0
    %v231 = vpop.f32.mrb[0].mxu0
    %232 = vdwg.mxu0
    %v233 = vmax.f32 %v228, 0.0
    %v234 = vpack.c.bf16 %v233, %v233
    %s235 = scalar_lea.vmem [#allocation5], 128
    %v236 = vld [vmem:[%s235] sm:$0xf]
    %v237 = vld [vmem:[%s235 + $0x4] sm:$0xf]
    %v238 = vld [vmem:[%s235 + $0x8] sm:$0xf]
    %v239 = vld [vmem:[%s235 + $0xc] sm:$0xf]
    %v240 = vld [vmem:[%s235 + $0x10] sm:$0xf]
    %v241 = vld [vmem:[%s235 + $0x14] sm:$0xf]
    %v242 = vld [vmem:[%s235 + $0x18] sm:$0xf]
    %v243 = vld [vmem:[%s235 + $0x1c] sm:$0xf]
    %v244 = vld [vmem:[%s235 + $0x20] sm:$0xf]
    %v245 = vld [vmem:[%s235 + $0x24] sm:$0xf]
    %v246 = vld [vmem:[%s235 + $0x28] sm:$0xf]
    %v247 = vld [vmem:[%s235 + $0x2c] sm:$0xf]
    %v248 = vld [vmem:[%s235 + $0x30] sm:$0xf]
    %v249 = vld [vmem:[%s235 + $0x34] sm:$0xf]
    %v250 = vld [vmem:[%s235 + $0x38] sm:$0xf]
    %v251 = vld [vmem:[%s235 + $0x3c] sm:$0xf]
    %v252 = vlaneseq
    %v253 = vshrl.u32 %v252, 7
    %v254 = vsub.s32 2, %v253
    %v255 = vrot.slane %v57, %v254
    %v272 = vunpack.c.l.b16 %v236
    %v273 = vunpack.c.l.b16 %v237
    %v274 = vunpack.c.l.b16 %v238
    %v275 = vunpack.c.l.b16 %v239
    %v276 = vunpack.c.l.b16 %v240
    %v277 = vunpack.c.l.b16 %v241
    %v278 = vunpack.c.l.b16 %v242
    %v279 = vunpack.c.l.b16 %v243
    %v280 = vunpack.c.l.b16 %v244
    %v281 = vunpack.c.l.b16 %v245
    %v282 = vunpack.c.l.b16 %v246
    %v283 = vunpack.c.l.b16 %v247
    %v284 = vunpack.c.l.b16 %v248
    %v285 = vunpack.c.l.b16 %v249
    %v286 = vunpack.c.l.b16 %v250
    %v287 = vunpack.c.l.b16 %v251
    %v288 = vpack.c.b16 %v273, %v272
    %v289 = vpack.c.b16 %v275, %v274
    %v290 = vpack.c.b16 %v277, %v276
    %v291 = vpack.c.b16 %v279, %v278
    %v292 = vpack.c.b16 %v281, %v280
    %v293 = vpack.c.b16 %v283, %v282
    %v294 = vpack.c.b16 %v285, %v284
    %v295 = vpack.c.b16 %v287, %v286
    %304 = vmatprep.subr.bf16.mxu0 0
    %305 = vmatpush1.bf16.msra.mxu0 %v288
    %306 = vmatprep.subr.bf16.mxu0 0
    %307 = vmatpush1.bf16.msra.mxu0 %v289
    %308 = vmatprep.subr.bf16.mxu0 0
    %309 = vmatpush1.bf16.msra.mxu0 %v290
    %310 = vmatprep.subr.bf16.mxu0 0
    %311 = vmatpush1.bf16.msra.mxu0 %v291
    %312 = vmatprep.subr.bf16.mxu0 0
    %313 = vmatpush1.bf16.msra.mxu0 %v292
    %314 = vmatprep.subr.bf16.mxu0 0
    %315 = vmatpush1.bf16.msra.mxu0 %v293
    %316 = vmatprep.subr.bf16.mxu0 0
    %317 = vmatpush1.bf16.msra.mxu0 %v294
    %318 = vmatprep.subr.bf16.mxu0 0
    %319 = vmatpush1.bf16.msra.mxu0 %v295
    %320 = vmatprep.subr.bf16.mxu0 0
    %321 = vmatpush1.bf16.msra.mxu0 0
    %322 = vmatprep.subr.bf16.mxu0 0
    %323 = vmatpush1.bf16.msra.mxu0 0
    %324 = vmatprep.subr.bf16.mxu0 0
    %325 = vmatpush1.bf16.msra.mxu0 0
    %326 = vmatprep.subr.bf16.mxu0 0
    %327 = vmatpush1.bf16.msra.mxu0 0
    %328 = vmatprep.subr.bf16.mxu0 0
    %329 = vmatpush1.bf16.msra.mxu0 0
    %330 = vmatprep.subr.bf16.mxu0 0
    %331 = vmatpush1.bf16.msra.mxu0 0
    %332 = vmatprep.subr.bf16.mxu0 0
    %333 = vmatpush1.bf16.msra.mxu0 0
    %334 = vmatprep.subr.bf16.mxu0 0
    %335 = vmatpush1.bf16.msra.mxu0 0
    %336 = vmatprep.mubr.bf16.mxu0 0
    %337 = vmatmul.mubr.bf16.gmra.mrb[0].mxu0 %v234
    %v338 = vpop.f32.mrb[0].mxu0
    %v339 = vadd.f32 %v255, %v338
    %v340 = vpop.f32.mrb[0].mxu0
    %v341 = vpop.f32.mrb[0].mxu0
    %v342 = vpop.f32.mrb[0].mxu0
    %343 = vdwg.mxu0
    %v344 = vpack.c.bf16 %v339, %v339
    %345 = vst [vmem:[#allocation8] sm:$0xf] %v344
    // Predicated region
    $region26: #{qvalue_forward.1} parent=1 // pred_check
      _
    $region27: #{qvalue_forward.1} parent=1 // pred_check_branch
      %347 = sbr.rel (0) target = $region29
    $region28: #{qvalue_forward.1} parent=1 // pred_region
      %s349 = ssub.s32 64, 64
      %350 = vsyncadd [#allocation4], %s349
      %s352 = sshll.u32 [#allocation8], 4
      %s353 = int_to_ptr.vmem [resolvable:$true] %s352
      %355 = dma.vmem_to_hbm [thread:$0]  %s353, 64, %s3, [#allocation4]
    $region29: #{qvalue_forward.1} parent=1 // pred_fallthru
      _
    // Predicated region
    $region30: #{qvalue_forward.1} parent=1 // pred_check
      _
    $region31: #{qvalue_forward.1} parent=1 // pred_check_branch
      %357 = sbr.rel (0) target = $region33
    $region32: #{qvalue_forward.1} parent=1 // pred_region
      %358 = dma.done [#allocation4], 64
    $region33: #{qvalue_forward.1} parent=1 // pred_fallthru
      _
    %359 = vsyncpa [#allocation3], 1
    %360 = vsyncpa [#allocation6], 1
    %361 = vsyncpa [#allocation4], 1

</llo_original>
